<compile_context>
chip_gen: v7x
topology: tpu7x:2x2x1
jax: 0.10.0
libtpu: 0.0.40
codegen_flags: <defaults>
</compile_context>

<pallas_src>
import jax
import jax.numpy as jnp
from jax.experimental import pallas as pl
from jax.experimental.pallas import tpu as pltpu


def mlp_kernel(xt_ref, w1_ref, b1_ref, w2_ref, b2_ref, w3_ref, b3_ref, ot_ref):
    """Fused 3-layer MLP on one batch tile, batch on the lane axis.

    xt_ref: (1, tile)       w1_ref/b1_ref: (64, 1)
    w2_ref: (32, 64), b2_ref: (32, 1)
    w3_ref: (4, 32),  b3_ref: (4, 1)
    ot_ref: (4, tile)
    """
    xt = xt_ref[...]                                                  # (1, tile)

    # Layer 1: contraction length 1 -> VPU broadcast outer product, not MXU.
    h1 = jnp.maximum(w1_ref[...] * xt + b1_ref[...], 0.0)             # (64, tile)

    # Layers 2/3: MXU matmuls, batch dim is the large N (lane) axis.
    h2 = jnp.dot(w2_ref[...], h1, preferred_element_type=jnp.float32) + b2_ref[...]
    h2 = jnp.maximum(h2, 0.0)                                         # (32, tile)
    h3 = jnp.dot(w3_ref[...], h2, preferred_element_type=jnp.float32) + b3_ref[...]

    ot_ref[...] = h3                                                  # (4, tile), lane-dense store


def _round_up(n, m):
    return (n + m - 1) // m * m


def deep_nn_forward(x, params, *, batch_tile=4096, min_grid_steps=4,
                    transpose_output=False):
    """DeepNN forward.

    x: (B, 1) float32. params: PyTorch-layout weights (out, in), biases (out, 1).
    Returns (4, B) feature-major by default; pass transpose_output=True for the
    PyTorch-shaped (B, 4) (costs an extra XLA relayout over the whole output).
    """
    B, in_features = x.shape
    assert in_features == 1, "DeepNN takes a single input feature"

    # --- choose a lane-dense tile: multiple of 128, <= batch_tile, and small
    # enough that the grid has >= min_grid_steps steps when B allows it.
    tile = min(batch_tile, _round_up(B, 128))
    if B >= min_grid_steps * 128:
        tile = min(tile, max(128, (B // min_grid_steps) // 128 * 128))
    tile = max(128, tile // 128 * 128)
    B_pad = _round_up(B, tile)
    n_steps = B_pad // tile

    w1, b1 = params["w1"], params["b1"]   # (64, 1), (64, 1)
    w2, b2 = params["w2"], params["b2"]   # (32, 64), (32, 1)
    w3, b3 = params["w3"], params["b3"]   # (4, 32), (4, 1)
    out_features = w3.shape[0]

    # Batch onto the lane axis. (B,1)->(1,B) is a free reshape (size-1 dim).
    xt = x.reshape(1, B)
    if B_pad != B:
        xt = jnp.pad(xt, ((0, 0), (0, B_pad - B)))

    full = lambda a: pl.BlockSpec(a.shape, lambda i: (0, 0))

    # Advisory cost hint so XLA can overlap neighbors with this short kernel.
    macs = 1 * 64 + 64 * 32 + 32 * 4                                   # 2240 / element
    weight_bytes = sum(int(a.size) * 4 for a in (w1, b1, w2, b2, w3, b3))
    cost = pl.CostEstimate(
        flops=2 * macs * B_pad,
        transcendentals=0,
        bytes_accessed=4 * B_pad + 4 * out_features * B_pad + weight_bytes,
    )

    # Rough per-step VMEM footprint (intermediates + double-buffered blocks).
    est_vmem = 448 * tile + 64 * 1024
    compiler_kwargs = dict(dimension_semantics=("parallel",))
    if est_vmem > 12 * 1024 * 1024:
        # Only needed for very large tiles (esp. v5e's 16 MiB scoped default).
        compiler_kwargs["vmem_limit_bytes"] = min(int(est_vmem * 2), 48 * 1024 * 1024)

    out_t = pl.pallas_call(
        mlp_kernel,
        out_shape=jax.ShapeDtypeStruct((out_features, B_pad), jnp.float32),
        grid_spec=pltpu.PrefetchScalarGridSpec(
            num_scalar_prefetch=0,
            grid=(n_steps,),
            in_specs=[
                pl.BlockSpec((1, tile), lambda i: (0, i)),             # x^T tile (lane-dense)
                full(w1), full(b1),
                full(w2), full(b2),
                full(w3), full(b3),
            ],
            out_specs=pl.BlockSpec((out_features, tile), lambda i: (0, i)),
        ),
        compiler_params=pltpu.CompilerParams(**compiler_kwargs),
        cost_estimate=cost,
    )(xt, w1, b1, w2, b2, w3, b3)

    if B_pad != B:
        out_t = out_t[:, :B]
    if transpose_output:
        # PyTorch-shaped (B, 4): documented extra relayout over the whole output.
        return out_t.T
    return out_t                                                       # (4, B)


def init_params(key):
    """Deterministic init mimicking PyTorch Linear's U(-1/sqrt(fan_in), 1/sqrt(fan_in)).

    Weights use PyTorch layout (out_features, in_features); biases kept as (out, 1) columns.
    """
    dims = [(1, 64), (64, 32), (32, 4)]
    params = {}
    for idx, (fan_in, fan_out) in enumerate(dims, start=1):
        key, kw, kb = jax.random.split(key, 3)
        bound = 1.0 / (fan_in ** 0.5)
        params[f"w{idx}"] = jax.random.uniform(
            kw, (fan_out, fan_in), jnp.float32, -bound, bound)
        params[f"b{idx}"] = jax.random.uniform(
            kb, (fan_out, 1), jnp.float32, -bound, bound)
    return params


def reference_forward(x, params):
    # Standard (batch, features) orientation, identical to PyTorch: x @ W.T + b.
    h1 = jnp.maximum(x @ params["w1"].T + params["b1"].T, 0.0)
    h2 = jnp.maximum(h1 @ params["w2"].T + params["b2"].T, 0.0)
    return h2 @ params["w3"].T + params["b3"].T


if __name__ == "__main__":
    key = jax.random.PRNGKey(0)
    key, kx, kx2 = jax.random.split(key, 3)
    params = init_params(key)

    # Lane-dense batch; wrapper caps the tile to 128 here -> 4 grid steps, so
    # v7x's dual TensorCores each get >= 2 steps to pipeline.
    B = 512
    x = jax.random.normal(kx, (B, 1), jnp.float32)

    out_t = deep_nn_forward(x, params)                       # (4, B) feature-major
    out_t = jax.block_until_ready(out_t)
    ref = reference_forward(x, params)
    assert out_t.shape == (4, B), out_t.shape
    assert jnp.allclose(out_t, ref.T, atol=1e-5, rtol=1e-5), "mismatch vs JAX reference"

    # PyTorch-shaped path (explicit transpose) still matches the module output.
    out = jax.block_until_ready(deep_nn_forward(x, params, transpose_output=True))
    assert out.shape == (B, 4), out.shape
    assert jnp.allclose(out, ref, atol=1e-5, rtol=1e-5), "mismatch (B,4) vs JAX reference"

    # Ragged batch (not a multiple of 128) exercises the padding path.
    B2 = 300
    x2 = jax.random.normal(kx2, (B2, 1), jnp.float32)
    out2 = jax.block_until_ready(deep_nn_forward(x2, params))
    assert out2.shape == (4, B2), out2.shape
    assert jnp.allclose(out2, reference_forward(x2, params).T, atol=1e-5, rtol=1e-5)

    print("KERNEL_OK")
</pallas_src>

<mosaic_0001>
module attributes {stable_mosaic.version = 11 : i64} {
  func.func @mlp_kernel(%arg0: i32, %arg1: memref<1x128xf32, #tpu.memory_space<vmem>>, %arg2: memref<64x1xf32, #tpu.memory_space<vmem>>, %arg3: memref<64x1xf32, #tpu.memory_space<vmem>>, %arg4: memref<32x64xf32, #tpu.memory_space<vmem>>, %arg5: memref<32x1xf32, #tpu.memory_space<vmem>>, %arg6: memref<4x32xf32, #tpu.memory_space<vmem>>, %arg7: memref<4x1xf32, #tpu.memory_space<vmem>>, %arg8: memref<4x128xf32, #tpu.memory_space<vmem>>) attributes {dimension_semantics = [#tpu.dimension_semantics<parallel>], iteration_bounds = array<i64: 4>, scalar_prefetch = 0 : i64, scratch_operands = 0 : i64, tpu.core_type = #tpu.core_type<tc>, window_params = [{transform_indices = @transform_0, window_bounds = array<i64: 1, 128>}, {pipeline_mode = #tpu.pipeline_mode<synchronous>, transform_indices = @transform_1, window_bounds = array<i64: 64, 1>}, {pipeline_mode = #tpu.pipeline_mode<synchronous>, transform_indices = @transform_2, window_bounds = array<i64: 64, 1>}, {pipeline_mode = #tpu.pipeline_mode<synchronous>, transform_indices = @transform_3, window_bounds = array<i64: 32, 64>}, {pipeline_mode = #tpu.pipeline_mode<synchronous>, transform_indices = @transform_4, window_bounds = array<i64: 32, 1>}, {pipeline_mode = #tpu.pipeline_mode<synchronous>, transform_indices = @transform_5, window_bounds = array<i64: 4, 32>}, {pipeline_mode = #tpu.pipeline_mode<synchronous>, transform_indices = @transform_6, window_bounds = array<i64: 4, 1>}, {transform_indices = @transform_7, window_bounds = array<i64: 4, 128>}]} {
    %c0 = arith.constant 0 : index
    %c0_0 = arith.constant 0 : index
    %0 = vector.load %arg1[%c0, %c0_0] : memref<1x128xf32, #tpu.memory_space<vmem>>, vector<1x128xf32>
    %c0_1 = arith.constant 0 : index
    %c0_2 = arith.constant 0 : index
    %1 = vector.load %arg2[%c0_1, %c0_2] : memref<64x1xf32, #tpu.memory_space<vmem>>, vector<64x1xf32>
    %2 = vector.broadcast %1 : vector<64x1xf32> to vector<64x128xf32>
    %3 = vector.broadcast %0 : vector<1x128xf32> to vector<64x128xf32>
    %4 = arith.mulf %2, %3 : vector<64x128xf32>
    %c0_3 = arith.constant 0 : index
    %c0_4 = arith.constant 0 : index
    %5 = vector.load %arg3[%c0_3, %c0_4] : memref<64x1xf32, #tpu.memory_space<vmem>>, vector<64x1xf32>
    %6 = vector.broadcast %5 : vector<64x1xf32> to vector<64x128xf32>
    %7 = arith.addf %4, %6 : vector<64x128xf32>
    %cst = arith.constant 0.000000e+00 : f32
    %8 = vector.broadcast %cst : f32 to vector<64x128xf32>
    %9 = arith.maximumf %7, %8 : vector<64x128xf32>
    %c0_5 = arith.constant 0 : index
    %c0_6 = arith.constant 0 : index
    %10 = vector.load %arg4[%c0_5, %c0_6] : memref<32x64xf32, #tpu.memory_space<vmem>>, vector<32x64xf32>
    %cst_7 = arith.constant dense<0.000000e+00> : vector<32x128xf32>
    %11 = tpu.matmul %10, %9, %cst_7 {dimension_numbers = #tpu.dot_dimension_numbers<[1], [0], [0], [1], [0, 0, 1, 1], [], []>} : vector<32x64xf32>, vector<64x128xf32>, vector<32x128xf32> -> vector<32x128xf32>
    %c0_8 = arith.constant 0 : index
    %c0_9 = arith.constant 0 : index
    %12 = vector.load %arg5[%c0_8, %c0_9] : memref<32x1xf32, #tpu.memory_space<vmem>>, vector<32x1xf32>
    %13 = vector.broadcast %12 : vector<32x1xf32> to vector<32x128xf32>
    %14 = arith.addf %11, %13 : vector<32x128xf32>
    %cst_10 = arith.constant 0.000000e+00 : f32
    %15 = vector.broadcast %cst_10 : f32 to vector<32x128xf32>
    %16 = arith.maximumf %14, %15 : vector<32x128xf32>
    %c0_11 = arith.constant 0 : index
    %c0_12 = arith.constant 0 : index
    %17 = vector.load %arg6[%c0_11, %c0_12] : memref<4x32xf32, #tpu.memory_space<vmem>>, vector<4x32xf32>
    %cst_13 = arith.constant dense<0.000000e+00> : vector<4x128xf32>
    %18 = tpu.matmul %17, %16, %cst_13 {dimension_numbers = #tpu.dot_dimension_numbers<[1], [0], [0], [1], [0, 0, 1, 1], [], []>} : vector<4x32xf32>, vector<32x128xf32>, vector<4x128xf32> -> vector<4x128xf32>
    %c0_14 = arith.constant 0 : index
    %c0_15 = arith.constant 0 : index
    %19 = vector.load %arg7[%c0_14, %c0_15] : memref<4x1xf32, #tpu.memory_space<vmem>>, vector<4x1xf32>
    %20 = vector.broadcast %19 : vector<4x1xf32> to vector<4x128xf32>
    %21 = arith.addf %18, %20 : vector<4x128xf32>
    %c0_16 = arith.constant 0 : index
    %c0_17 = arith.constant 0 : index
    %22 = vector.load %arg8[%c0_16, %c0_17] : memref<4x128xf32, #tpu.memory_space<vmem>>, vector<4x128xf32>
    tpu.vector_store %arg8[%c0_16, %c0_17], %21 {strides = array<i32>} : memref<4x128xf32, #tpu.memory_space<vmem>>, vector<4x128xf32>,
    return
  }
  func.func @transform_0(%arg0: i32) -> (i32, i32) {
    %c0_i32 = arith.constant 0 : i32
    %c0_i32_0 = arith.constant 0 : i32
    return %c0_i32, %arg0 : i32, i32
  }
  func.func @transform_1(%arg0: i32) -> (i32, i32) {
    %c0_i32 = arith.constant 0 : i32
    %c0_i32_0 = arith.constant 0 : i32
    %c0_i32_1 = arith.constant 0 : i32
    return %c0_i32, %c0_i32_0 : i32, i32
  }
  func.func @transform_2(%arg0: i32) -> (i32, i32) {
    %c0_i32 = arith.constant 0 : i32
    %c0_i32_0 = arith.constant 0 : i32
    %c0_i32_1 = arith.constant 0 : i32
    return %c0_i32, %c0_i32_0 : i32, i32
  }
  func.func @transform_3(%arg0: i32) -> (i32, i32) {
    %c0_i32 = arith.constant 0 : i32
    %c0_i32_0 = arith.constant 0 : i32
    %c0_i32_1 = arith.constant 0 : i32
    return %c0_i32, %c0_i32_0 : i32, i32
  }
  func.func @transform_4(%arg0: i32) -> (i32, i32) {
    %c0_i32 = arith.constant 0 : i32
    %c0_i32_0 = arith.constant 0 : i32
    %c0_i32_1 = arith.constant 0 : i32
    return %c0_i32, %c0_i32_0 : i32, i32
  }
  func.func @transform_5(%arg0: i32) -> (i32, i32) {
    %c0_i32 = arith.constant 0 : i32
    %c0_i32_0 = arith.constant 0 : i32
    %c0_i32_1 = arith.constant 0 : i32
    return %c0_i32, %c0_i32_0 : i32, i32
  }
  func.func @transform_6(%arg0: i32) -> (i32, i32) {
    %c0_i32 = arith.constant 0 : i32
    %c0_i32_0 = arith.constant 0 : i32
    %c0_i32_1 = arith.constant 0 : i32
    return %c0_i32, %c0_i32_0 : i32, i32
  }
  func.func @transform_7(%arg0: i32) -> (i32, i32) {
    %c0_i32 = arith.constant 0 : i32
    %c0_i32_0 = arith.constant 0 : i32
    return %c0_i32, %arg0 : i32, i32
  }
}

</mosaic_0001>

<llo_original>
// kernel: tpu_custom_call.1
$region0: #{tpu_custom_call.1}
  #allocation0 [shape = 'u32[]', space=smem, size = 0x4, offset = 0x4, fixed_abs, tag = 'smem constant byte address 0x4 - core index']
  #allocation1 [shape = 'u32[144,128]{1,0:T(1,128)}', space=vmem, size = 0x12000, scoped, tag = 'internal scratch']
  %s0 = inlined_call_operand.vmem [shape: f32[1,512], index: 0, kind: input, shape index: {}]
  %s1 = inlined_call_operand.vmem [shape: f32[64,1], index: 1, kind: input, shape index: {}]
  %s2 = inlined_call_operand.vmem [shape: f32[64,1], index: 2, kind: input, shape index: {}]
  %s3 = inlined_call_operand.vmem [shape: f32[32,64], index: 3, kind: input, shape index: {}]
  %s4 = inlined_call_operand.vmem [shape: f32[32,1], index: 4, kind: input, shape index: {}]
  %s5 = inlined_call_operand.vmem [shape: f32[4,32], index: 5, kind: input, shape index: {}]
  %s6 = inlined_call_operand.vmem [shape: f32[4,1], index: 6, kind: input, shape index: {}]
  %s7 = inlined_call_operand.hbm [shape: f32[4,512], index: 7, kind: output, shape index: {}]
  %s8 = sld [smem:[#allocation0]]
  $region61: #{tpu_custom_call.1} parent=0
    _
  %s10 = ssub.s32 1, %s8
  %s11 = scalar_select 0, %s10, %s8
  $region1: #{tpu_custom_call.1} parent=0
    #allocation2 [shape = 'u8[4096]{0}', space=vmem, size = 0x1000, scoped, tag = 'output window, operand 0']
    #allocation3 [shape = 's32[2]{0}', space=sflag, size = 0x8, scoped, tag = 'scoped memory for tpu_custom_call.1']
    %12 = vsyncpa [#allocation3], 0
    %s13 = scalar_lea.sflag [#allocation3], 1
    %14 = vsyncpa %s13, 0
    loop: start=0, step=1, limit=6
    $region2: #{tpu_custom_call.1} parent=1 // loop_pre_header
      _
    $region3: #{tpu_custom_call.1} parent=1 // loop_header
      %s16 = sphi 0, %s20
      %p17 = scmp.ge.s32.totalorder %s16, 6
      %s26 = sphi 0, %s28
      %s29 = sphi 0, %s26
      %s30 = sphi 0, %s29
      %s46 = sphi 0, %s30
      %s50 = sphi 0, %s50
      %s52 = sphi 0, %s50
      %s53 = sphi 0, %s52
      %s67 = sphi 0, %s53
      %s71 = sphi 0, %s71
      %s73 = sphi 0, %s71
      %s74 = sphi 0, %s73
      %s88 = sphi 0, %s74
      %s92 = sphi 0, %s92
      %s94 = sphi 0, %s92
      %s95 = sphi 0, %s94
      %s109 = sphi 0, %s95
      %s113 = sphi 0, %s113
      %s115 = sphi 0, %s113
      %s116 = sphi 0, %s115
      %s130 = sphi 0, %s116
      %s134 = sphi 0, %s134
      %s136 = sphi 0, %s134
      %s137 = sphi 0, %s136
      %s151 = sphi 0, %s137
      %s155 = sphi 0, %s155
      %s157 = sphi 0, %s155
      %s158 = sphi 0, %s157
      %s172 = sphi 0, %s158
      %s178 = sphi 0, %s180
      %s181 = sphi 0, %s178
      %s182 = sphi 0, %s181
      %s198 = sphi 0, %s182
    $region4: #{tpu_custom_call.1} parent=1 // loop_header_branch
      %19 = sbr.rel (%p17) target = $region8
    $region5: #{tpu_custom_call.1} parent=1 // loop_body
      %s21 = ssub.s32 %s16, 1
      %s22 = ssub.s32 %s16, 2
      %s23 = sadd.s32 %s16, 1
      %s24 = ssub.s32 %s16, %s23
      %p25 = scmp.eq.s32.totalorder %s24, 0
      %s27 = sadd.s32 %s26, 1
      %s28 = scalar_select %p25, %s26, %s27
      %p31 = pneg %p25
      %p32 = scmp.eq.s32.totalorder %s16, 3
      %p33 = por %p31, %p32
      %p34 = scmp.ne.s32.totalorder %s26, %s29
      %p35 = scmp.eq.s32.totalorder %s16, 0
      %p36 = por %p34, %p35
      %p37 = scmp.ne.s32.totalorder %s26, %s29
      %p38 = scmp.eq.s32.totalorder %s21, 3
      %p39 = por %p37, %p38
      %p40 = scmp.ne.s32.totalorder %s29, %s30
      %p41 = scmp.eq.s32.totalorder %s21, 0
      %p42 = por %p40, %p41
      %p43 = scmp.ne.s32.totalorder %s29, %s30
      %p44 = scmp.eq.s32.totalorder %s22, 3
      %p45 = por %p43, %p44
      %p47 = scmp.ne.s32.totalorder %s30, %s46
      %p48 = scmp.eq.s32.totalorder %s22, 0
      %p49 = por %p47, %p48
      %s51 = sadd.s32 %s50, 1
      %p54 = scmp.eq.s32.totalorder %s16, 3
      %p55 = scmp.ne.s32.totalorder %s50, %s52
      %p56 = scmp.eq.s32.totalorder %s16, 0
      %p57 = por %p55, %p56
      %p58 = scmp.ne.s32.totalorder %s50, %s52
      %p59 = scmp.eq.s32.totalorder %s21, 3
      %p60 = por %p58, %p59
      %p61 = scmp.ne.s32.totalorder %s52, %s53
      %p62 = scmp.eq.s32.totalorder %s21, 0
      %p63 = por %p61, %p62
      %p64 = scmp.ne.s32.totalorder %s52, %s53
      %p65 = scmp.eq.s32.totalorder %s22, 3
      %p66 = por %p64, %p65
      %p68 = scmp.ne.s32.totalorder %s53, %s67
      %p69 = scmp.eq.s32.totalorder %s22, 0
      %p70 = por %p68, %p69
      %s72 = sadd.s32 %s71, 1
      %p75 = scmp.eq.s32.totalorder %s16, 3
      %p76 = scmp.ne.s32.totalorder %s71, %s73
      %p77 = scmp.eq.s32.totalorder %s16, 0
      %p78 = por %p76, %p77
      %p79 = scmp.ne.s32.totalorder %s71, %s73
      %p80 = scmp.eq.s32.totalorder %s21, 3
      %p81 = por %p79, %p80
      %p82 = scmp.ne.s32.totalorder %s73, %s74
      %p83 = scmp.eq.s32.totalorder %s21, 0
      %p84 = por %p82, %p83
      %p85 = scmp.ne.s32.totalorder %s73, %s74
      %p86 = scmp.eq.s32.totalorder %s22, 3
      %p87 = por %p85, %p86
      %p89 = scmp.ne.s32.totalorder %s74, %s88
      %p90 = scmp.eq.s32.totalorder %s22, 0
      %p91 = por %p89, %p90
      %s93 = sadd.s32 %s92, 1
      %p96 = scmp.eq.s32.totalorder %s16, 3
      %p97 = scmp.ne.s32.totalorder %s92, %s94
      %p98 = scmp.eq.s32.totalorder %s16, 0
      %p99 = por %p97, %p98
      %p100 = scmp.ne.s32.totalorder %s92, %s94
      %p101 = scmp.eq.s32.totalorder %s21, 3
      %p102 = por %p100, %p101
      %p103 = scmp.ne.s32.totalorder %s94, %s95
      %p104 = scmp.eq.s32.totalorder %s21, 0
      %p105 = por %p103, %p104
      %p106 = scmp.ne.s32.totalorder %s94, %s95
      %p107 = scmp.eq.s32.totalorder %s22, 3
      %p108 = por %p106, %p107
      %p110 = scmp.ne.s32.totalorder %s95, %s109
      %p111 = scmp.eq.s32.totalorder %s22, 0
      %p112 = por %p110, %p111
      %s114 = sadd.s32 %s113, 1
      %p117 = scmp.eq.s32.totalorder %s16, 3
      %p118 = scmp.ne.s32.totalorder %s113, %s115
      %p119 = scmp.eq.s32.totalorder %s16, 0
      %p120 = por %p118, %p119
      %p121 = scmp.ne.s32.totalorder %s113, %s115
      %p122 = scmp.eq.s32.totalorder %s21, 3
      %p123 = por %p121, %p122
      %p124 = scmp.ne.s32.totalorder %s115, %s116
      %p125 = scmp.eq.s32.totalorder %s21, 0
      %p126 = por %p124, %p125
      %p127 = scmp.ne.s32.totalorder %s115, %s116
      %p128 = scmp.eq.s32.totalorder %s22, 3
      %p129 = por %p127, %p128
      %p131 = scmp.ne.s32.totalorder %s116, %s130
      %p132 = scmp.eq.s32.totalorder %s22, 0
      %p133 = por %p131, %p132
      %s135 = sadd.s32 %s134, 1
      %p138 = scmp.eq.s32.totalorder %s16, 3
      %p139 = scmp.ne.s32.totalorder %s134, %s136
      %p140 = scmp.eq.s32.totalorder %s16, 0
      %p141 = por %p139, %p140
      %p142 = scmp.ne.s32.totalorder %s134, %s136
      %p143 = scmp.eq.s32.totalorder %s21, 3
      %p144 = por %p142, %p143
      %p145 = scmp.ne.s32.totalorder %s136, %s137
      %p146 = scmp.eq.s32.totalorder %s21, 0
      %p147 = por %p145, %p146
      %p148 = scmp.ne.s32.totalorder %s136, %s137
      %p149 = scmp.eq.s32.totalorder %s22, 3
      %p150 = por %p148, %p149
      %p152 = scmp.ne.s32.totalorder %s137, %s151
      %p153 = scmp.eq.s32.totalorder %s22, 0
      %p154 = por %p152, %p153
      %s156 = sadd.s32 %s155, 1
      %p159 = scmp.eq.s32.totalorder %s16, 3
      %p160 = scmp.ne.s32.totalorder %s155, %s157
      %p161 = scmp.eq.s32.totalorder %s16, 0
      %p162 = por %p160, %p161
      %p163 = scmp.ne.s32.totalorder %s155, %s157
      %p164 = scmp.eq.s32.totalorder %s21, 3
      %p165 = por %p163, %p164
      %p166 = scmp.ne.s32.totalorder %s157, %s158
      %p167 = scmp.eq.s32.totalorder %s21, 0
      %p168 = por %p166, %p167
      %p169 = scmp.ne.s32.totalorder %s157, %s158
      %p170 = scmp.eq.s32.totalorder %s22, 3
      %p171 = por %p169, %p170
      %p173 = scmp.ne.s32.totalorder %s158, %s172
      %p174 = scmp.eq.s32.totalorder %s22, 0
      %p175 = por %p173, %p174
      %s176 = ssub.s32 %s16, %s23
      %p177 = scmp.eq.s32.totalorder %s176, 0
      %s179 = sadd.s32 %s178, 1
      %s180 = scalar_select %p177, %s178, %s179
      %p183 = pneg %p177
      %p184 = scmp.eq.s32.totalorder %s16, 3
      %p185 = por %p183, %p184
      %p186 = scmp.ne.s32.totalorder %s178, %s181
      %p187 = scmp.eq.s32.totalorder %s16, 0
      %p188 = por %p186, %p187
      %p189 = scmp.ne.s32.totalorder %s178, %s181
      %p190 = scmp.eq.s32.totalorder %s21, 3
      %p191 = por %p189, %p190
      %p192 = scmp.ne.s32.totalorder %s181, %s182
      %p193 = scmp.eq.s32.totalorder %s21, 0
      %p194 = por %p192, %p193
      %p195 = scmp.ne.s32.totalorder %s181, %s182
      %p196 = scmp.eq.s32.totalorder %s22, 3
      %p197 = por %p195, %p196
      %p199 = scmp.ne.s32.totalorder %s182, %s198
      %p200 = scmp.eq.s32.totalorder %s22, 0
      %p201 = por %p199, %p200
      %p202 = scmp.le.s32.totalorder 1, %s16
      %p203 = scmp.lt.s32.totalorder %s16, 5
      %p204 = pnand %p202, %p203
      %p205 = pneg %p204
      // Predicated region
      $region9: #{tpu_custom_call.1} parent=5 // pred_check
        _
      $region10: #{tpu_custom_call.1} parent=5 // pred_check_branch
        %207 = sbr.rel (%p204) target = $region12
      $region11: #{tpu_custom_call.1} parent=5 // pred_region
        %s208 = ssub.s32 %s16, 1
        // Predicated region
        $region13: #{tpu_custom_call.1} parent=11 // pred_check
          %p209 = pneg %p63
        $region14: #{tpu_custom_call.1} parent=11 // pred_check_branch
          %211 = sbr.rel (%p209) target = $region16
        $region15: #{tpu_custom_call.1} parent=11 // pred_region
          _
        $region16: #{tpu_custom_call.1} parent=11 // pred_fallthru
          _
        // Predicated region
        $region17: #{tpu_custom_call.1} parent=11 // pred_check
          %p212 = pneg %p84
        $region18: #{tpu_custom_call.1} parent=11 // pred_check_branch
          %214 = sbr.rel (%p212) target = $region20
        $region19: #{tpu_custom_call.1} parent=11 // pred_region
          _
        $region20: #{tpu_custom_call.1} parent=11 // pred_fallthru
          _
        // Predicated region
        $region21: #{tpu_custom_call.1} parent=11 // pred_check
          %p215 = pneg %p105
        $region22: #{tpu_custom_call.1} parent=11 // pred_check_branch
          %217 = sbr.rel (%p215) target = $region24
        $region23: #{tpu_custom_call.1} parent=11 // pred_region
          _
        $region24: #{tpu_custom_call.1} parent=11 // pred_fallthru
          _
        // Predicated region
        $region25: #{tpu_custom_call.1} parent=11 // pred_check
          %p218 = pneg %p126
        $region26: #{tpu_custom_call.1} parent=11 // pred_check_branch
          %220 = sbr.rel (%p218) target = $region28
        $region27: #{tpu_custom_call.1} parent=11 // pred_region
          _
        $region28: #{tpu_custom_call.1} parent=11 // pred_fallthru
          _
        // Predicated region
        $region29: #{tpu_custom_call.1} parent=11 // pred_check
          %p221 = pneg %p147
        $region30: #{tpu_custom_call.1} parent=11 // pred_check_branch
          %223 = sbr.rel (%p221) target = $region32
        $region31: #{tpu_custom_call.1} parent=11 // pred_region
          _
        $region32: #{tpu_custom_call.1} parent=11 // pred_fallthru
          _
        // Predicated region
        $region33: #{tpu_custom_call.1} parent=11 // pred_check
          %p224 = pneg %p168
        $region34: #{tpu_custom_call.1} parent=11 // pred_check_branch
          %226 = sbr.rel (%p224) target = $region36
        $region35: #{tpu_custom_call.1} parent=11 // pred_region
          _
        $region36: #{tpu_custom_call.1} parent=11 // pred_fallthru
          _
      $region12: #{tpu_custom_call.1} parent=5 // pred_fallthru
        _
      %p227 = scmp.lt.s32.totalorder %s16, 4
      // Predicated region
      $region37: #{tpu_custom_call.1} parent=5 // pred_check
        %p228 = pneg %p227
      $region38: #{tpu_custom_call.1} parent=5 // pred_check_branch
        %230 = sbr.rel (%p228) target = $region40
      $region39: #{tpu_custom_call.1} parent=5 // pred_region
        // Predicated region
        $region41: #{tpu_custom_call.1} parent=39 // pred_check
          %p231 = pneg %p36
        $region42: #{tpu_custom_call.1} parent=39 // pred_check_branch
          %233 = sbr.rel (%p231) target = $region44
        $region43: #{tpu_custom_call.1} parent=39 // pred_region
          %p234 = scmp.lt.s32.totalorder %s16, 3
          %s235 = scalar_select %p234, %s16, 3
          %s236 = scalar_lea.vmem %s0, %s235
        $region44: #{tpu_custom_call.1} parent=39 // pred_fallthru
          _
      $region40: #{tpu_custom_call.1} parent=5 // pred_fallthru
        _
      %p237 = scmp.le.s32.totalorder 1, %s16
      %p238 = scmp.lt.s32.totalorder %s16, 5
      %p239 = pnand %p237, %p238
      %p240 = pneg %p239
      // Predicated region
      $region45: #{tpu_custom_call.1} parent=5 // pred_check
        _
      $region46: #{tpu_custom_call.1} parent=5 // pred_check_branch
        %242 = sbr.rel (%p239) target = $region48
      $region47: #{tpu_custom_call.1} parent=5 // pred_region
        %s243 = ssub.s32 %s16, 1
        %p244 = scmp.lt.s32.totalorder %s21, 3
        %s245 = scalar_select %p244, %s21, 3
        %s246 = scalar_lea.vmem %s0, %s245
        %p247 = pneg %p42
        %p248 = pneg %p39
        %p249 = pneg %p63
        %p250 = pneg %p60
        %p251 = pneg %p84
        %p252 = pneg %p81
        %p253 = pneg %p105
        %p254 = pneg %p102
        %p255 = pneg %p126
        %p256 = pneg %p123
        %p257 = pneg %p147
        %p258 = pneg %p144
        %p259 = pneg %p168
        %p260 = pneg %p165
        %p261 = pneg %p194
        %p262 = pneg %p191
        %s263 = sand.u32 %s181, 1
        %s264 = scalar_lea.sflag [#allocation3], %s263
        %s265 = sand.u32 %s181, 1
        %s266 = smul.addr %s265, 4
        %s267 = scalar_lea.vmem [#allocation2], %s266
        %p268 = scmp.lt.s32.totalorder %s21, 3
        %s269 = scalar_select %p268, %s21, 3
        %s270 = scalar_lea.vmem %s0, %s269
        %v271 = vld [vmem:[%s270] sm:$0x1]
        %v272 = vld [vmem:[%s1] sm:$0xff]
        %v273 = vld [vmem:[%s1 + $0x8] sm:$0xff]
        %v274 = vld [vmem:[%s1 + $0x10] sm:$0xff]
        %v275 = vld [vmem:[%s1 + $0x18] sm:$0xff]
        %v276 = vld [vmem:[%s1 + $0x20] sm:$0xff]
        %v277 = vld [vmem:[%s1 + $0x28] sm:$0xff]
        %v278 = vld [vmem:[%s1 + $0x30] sm:$0xff]
        %v279 = vld [vmem:[%s1 + $0x38] sm:$0xff]
        %281 = vset.pattern.permute.xlu0 0
        %282 = vperm.xlu0 %281, %v272
        %v283 = vpop.permute.xlu0 %282
        %286 = vset.pattern.permute.xlu0 0
        %287 = vperm.xlu0 %286, %v273
        %v288 = vpop.permute.xlu0 %287
        %291 = vset.pattern.permute.xlu0 0
        %292 = vperm.xlu0 %291, %v274
        %v293 = vpop.permute.xlu0 %292
        %296 = vset.pattern.permute.xlu0 0
        %297 = vperm.xlu0 %296, %v275
        %v298 = vpop.permute.xlu0 %297
        %301 = vset.pattern.permute.xlu0 0
        %302 = vperm.xlu0 %301, %v276
        %v303 = vpop.permute.xlu0 %302
        %306 = vset.pattern.permute.xlu0 0
        %307 = vperm.xlu0 %306, %v277
        %v308 = vpop.permute.xlu0 %307
        %311 = vset.pattern.permute.xlu0 0
        %312 = vperm.xlu0 %311, %v278
        %v313 = vpop.permute.xlu0 %312
        %316 = vset.pattern.permute.xlu0 0
        %317 = vperm.xlu0 %316, %v279
        %v318 = vpop.permute.xlu0 %317
        %v321 = vlaneseq
        %v322 = vshrl.u32 %v321, 7
        %v323 = vsub.s32 0, %v322
        %v324 = vrot.slane %v271, %v323
        %v326 = vmul.f32 %v283, %v324
        %v327 = vmul.f32 %v288, %v324
        %v328 = vmul.f32 %v293, %v324
        %v329 = vmul.f32 %v298, %v324
        %v330 = vmul.f32 %v303, %v324
        %v331 = vmul.f32 %v308, %v324
        %v332 = vmul.f32 %v313, %v324
        %v333 = vmul.f32 %v318, %v324
        %v334 = vld [vmem:[%s2] sm:$0xff]
        %v335 = vld [vmem:[%s2 + $0x8] sm:$0xff]
        %v336 = vld [vmem:[%s2 + $0x10] sm:$0xff]
        %v337 = vld [vmem:[%s2 + $0x18] sm:$0xff]
        %v338 = vld [vmem:[%s2 + $0x20] sm:$0xff]
        %v339 = vld [vmem:[%s2 + $0x28] sm:$0xff]
        %v340 = vld [vmem:[%s2 + $0x30] sm:$0xff]
        %v341 = vld [vmem:[%s2 + $0x38] sm:$0xff]
        %343 = vset.pattern.permute.xlu0 0
        %344 = vperm.xlu0 %343, %v334
        %v345 = vpop.permute.xlu0 %344
        %348 = vset.pattern.permute.xlu0 0
        %349 = vperm.xlu0 %348, %v335
        %v350 = vpop.permute.xlu0 %349
        %353 = vset.pattern.permute.xlu0 0
        %354 = vperm.xlu0 %353, %v336
        %v355 = vpop.permute.xlu0 %354
        %358 = vset.pattern.permute.xlu0 0
        %359 = vperm.xlu0 %358, %v337
        %v360 = vpop.permute.xlu0 %359
        %363 = vset.pattern.permute.xlu0 0
        %364 = vperm.xlu0 %363, %v338
        %v365 = vpop.permute.xlu0 %364
        %368 = vset.pattern.permute.xlu0 0
        %369 = vperm.xlu0 %368, %v339
        %v370 = vpop.permute.xlu0 %369
        %373 = vset.pattern.permute.xlu0 0
        %374 = vperm.xlu0 %373, %v340
        %v375 = vpop.permute.xlu0 %374
        %378 = vset.pattern.permute.xlu0 0
        %379 = vperm.xlu0 %378, %v341
        %v380 = vpop.permute.xlu0 %379
        %v382 = vadd.f32 %v326, %v345
        %v383 = vadd.f32 %v327, %v350
        %v384 = vadd.f32 %v328, %v355
        %v385 = vadd.f32 %v329, %v360
        %v386 = vadd.f32 %v330, %v365
        %v387 = vadd.f32 %v331, %v370
        %v388 = vadd.f32 %v332, %v375
        %v389 = vadd.f32 %v333, %v380
        %v390 = vmax.f32 %v382, 0.0
        %v391 = vmax.f32 %v383, 0.0
        %v392 = vmax.f32 %v384, 0.0
        %v393 = vmax.f32 %v385, 0.0
        %v394 = vmax.f32 %v386, 0.0
        %v395 = vmax.f32 %v387, 0.0
        %v396 = vmax.f32 %v388, 0.0
        %v397 = vmax.f32 %v389, 0.0
        %v398 = vld [vmem:[%s3] sm:$0xff]
        %v399 = vld [vmem:[%s3 + $0x8] sm:$0xff]
        %v400 = vld [vmem:[%s3 + $0x10] sm:$0xff]
        %v401 = vld [vmem:[%s3 + $0x18] sm:$0xff]
        %v402 = vld [vmem:[%s4] sm:$0xff]
        %v403 = vld [vmem:[%s4 + $0x8] sm:$0xff]
        %v404 = vld [vmem:[%s4 + $0x10] sm:$0xff]
        %v405 = vld [vmem:[%s4 + $0x18] sm:$0xff]
        %407 = vset.pattern.permute.xlu0 0
        %408 = vperm.xlu0 %407, %v402
        %v409 = vpop.permute.xlu0 %408
        %412 = vset.pattern.permute.xlu0 0
        %413 = vperm.xlu0 %412, %v403
        %v414 = vpop.permute.xlu0 %413
        %417 = vset.pattern.permute.xlu0 0
        %418 = vperm.xlu0 %417, %v404
        %v419 = vpop.permute.xlu0 %418
        %422 = vset.pattern.permute.xlu0 0
        %423 = vperm.xlu0 %422, %v405
        %v424 = vpop.permute.xlu0 %423
        %vm426 = vcmask 523264
        %v428 = vsel %vm426, %v398, 0
        %v431 = vsel %vm426, %v399, 0
        %v434 = vsel %vm426, %v400, 0
        %v437 = vsel %vm426, %v401, 0
        %439 = vmatprep.subr.mxu0 0.0
        %440 = vmatpush1.msra.mxu0 %v390
        %441 = vmatprep.subr.mxu0 0.0
        %442 = vmatpush1.msra.mxu0 %v391
        %443 = vmatprep.subr.mxu0 0.0
        %444 = vmatpush1.msra.mxu0 %v392
        %445 = vmatprep.subr.mxu0 0.0
        %446 = vmatpush1.msra.mxu0 %v393
        %447 = vmatprep.subr.mxu0 0.0
        %448 = vmatpush1.msra.mxu0 %v394
        %449 = vmatprep.subr.mxu0 0.0
        %450 = vmatpush1.msra.mxu0 %v395
        %451 = vmatprep.subr.mxu0 0.0
        %452 = vmatpush1.msra.mxu0 %v396
        %453 = vmatprep.subr.mxu0 0.0
        %454 = vmatpush1.msra.mxu0 %v397
        %455 = vmatprep.subr.mxu0 0.0
        %456 = vmatpush1.msra.mxu0 0.0
        %457 = vmatprep.subr.mxu0 0.0
        %458 = vmatpush1.msra.mxu0 0.0
        %459 = vmatprep.subr.mxu0 0.0
        %460 = vmatpush1.msra.mxu0 0.0
        %461 = vmatprep.subr.mxu0 0.0
        %462 = vmatpush1.msra.mxu0 0.0
        %463 = vmatprep.subr.mxu0 0.0
        %464 = vmatpush1.msra.mxu0 0.0
        %465 = vmatprep.subr.mxu0 0.0
        %466 = vmatpush1.msra.mxu0 0.0
        %467 = vmatprep.subr.mxu0 0.0
        %468 = vmatpush1.msra.mxu0 0.0
        %469 = vmatprep.subr.mxu0 0.0
        %470 = vmatpush1.msra.mxu0 0.0
        %471 = vmatprep.subr.mxu0 0.0
        %472 = vmatpush1.msra.mxu0 0.0
        %473 = vmatprep.subr.mxu0 0.0
        %474 = vmatpush1.msra.mxu0 0.0
        %475 = vmatprep.subr.mxu0 0.0
        %476 = vmatpush1.msra.mxu0 0.0
        %477 = vmatprep.subr.mxu0 0.0
        %478 = vmatpush1.msra.mxu0 0.0
        %479 = vmatprep.subr.mxu0 0.0
        %480 = vmatpush1.msra.mxu0 0.0
        %481 = vmatprep.subr.mxu0 0.0
        %482 = vmatpush1.msra.mxu0 0.0
        %483 = vmatprep.subr.mxu0 0.0
        %484 = vmatpush1.msra.mxu0 0.0
        %485 = vmatprep.subr.mxu0 0.0
        %486 = vmatpush1.msra.mxu0 0.0
        %487 = vmatprep.subr.mxu0 0.0
        %488 = vmatpush1.msra.mxu0 0.0
        %489 = vmatprep.subr.mxu0 0.0
        %490 = vmatpush1.msra.mxu0 0.0
        %491 = vmatprep.subr.mxu0 0.0
        %492 = vmatpush1.msra.mxu0 0.0
        %493 = vmatprep.subr.mxu0 0.0
        %494 = vmatpush1.msra.mxu0 0.0
        %495 = vmatprep.subr.mxu0 0.0
        %496 = vmatpush1.msra.mxu0 0.0
        %497 = vmatprep.subr.mxu0 0.0
        %498 = vmatpush1.msra.mxu0 0.0
        %499 = vmatprep.subr.mxu0 0.0
        %500 = vmatpush1.msra.mxu0 0.0
        %501 = vmatprep.subr.mxu0 0.0
        %502 = vmatpush1.msra.mxu0 0.0
        %503 = vmatprep.mubr.f32.mxu0 0.0
        %504 = vmatmul.mubr.f32.gmra.mrb[0].mxu0 %v428
        %v505 = vpop.f32.mrb[0].mxu0
        %v506 = vadd.f32 %v409, %v505
        %v507 = vpop.f32.mrb[0].mxu0
        %508 = vmatprep.mubr.f32.mxu0 0.0
        %509 = vmatmul.mubr.f32.gmra.mrb[0].mxu0 %v431
        %v510 = vpop.f32.mrb[0].mxu0
        %v511 = vadd.f32 %v414, %v510
        %v512 = vpop.f32.mrb[0].mxu0
        %513 = vmatprep.mubr.f32.mxu0 0.0
        %514 = vmatmul.mubr.f32.gmra.mrb[0].mxu0 %v434
        %v515 = vpop.f32.mrb[0].mxu0
        %v516 = vadd.f32 %v419, %v515
        %v517 = vpop.f32.mrb[0].mxu0
        %518 = vmatprep.mubr.f32.mxu0 0.0
        %519 = vmatmul.mubr.f32.gmra.mrb[0].mxu0 %v437
        %v520 = vpop.f32.mrb[0].mxu0
        %v521 = vadd.f32 %v424, %v520
        %v522 = vpop.f32.mrb[0].mxu0
        %523 = vdwg.mxu0
        %v524 = vmax.f32 %v506, 0.0
        %v525 = vmax.f32 %v511, 0.0
        %v526 = vmax.f32 %v516, 0.0
        %v527 = vmax.f32 %v521, 0.0
        %v528 = vld [vmem:[%s5] sm:$0xf]
        %v529 = vld [vmem:[%s6] sm:$0xf]
        %531 = vset.pattern.permute.xlu0 0
        %532 = vperm.xlu0 %531, %v529
        %v533 = vpop.permute.xlu0 %532
        %vm535 = vcmask 261120
        %v537 = vsel %vm535, %v528, 0
        %539 = vmatprep.subr.mxu0 0.0
        %540 = vmatpush1.msra.mxu0 %v524
        %541 = vmatprep.subr.mxu0 0.0
        %542 = vmatpush1.msra.mxu0 %v525
        %543 = vmatprep.subr.mxu0 0.0
        %544 = vmatpush1.msra.mxu0 %v526
        %545 = vmatprep.subr.mxu0 0.0
        %546 = vmatpush1.msra.mxu0 %v527
        %547 = vmatprep.subr.mxu0 0.0
        %548 = vmatpush1.msra.mxu0 0.0
        %549 = vmatprep.subr.mxu0 0.0
        %550 = vmatpush1.msra.mxu0 0.0
        %551 = vmatprep.subr.mxu0 0.0
        %552 = vmatpush1.msra.mxu0 0.0
        %553 = vmatprep.subr.mxu0 0.0
        %554 = vmatpush1.msra.mxu0 0.0
        %555 = vmatprep.subr.mxu0 0.0
        %556 = vmatpush1.msra.mxu0 0.0
        %557 = vmatprep.subr.mxu0 0.0
        %558 = vmatpush1.msra.mxu0 0.0
        %559 = vmatprep.subr.mxu0 0.0
        %560 = vmatpush1.msra.mxu0 0.0
        %561 = vmatprep.subr.mxu0 0.0
        %562 = vmatpush1.msra.mxu0 0.0
        %563 = vmatprep.subr.mxu0 0.0
        %564 = vmatpush1.msra.mxu0 0.0
        %565 = vmatprep.subr.mxu0 0.0
        %566 = vmatpush1.msra.mxu0 0.0
        %567 = vmatprep.subr.mxu0 0.0
        %568 = vmatpush1.msra.mxu0 0.0
        %569 = vmatprep.subr.mxu0 0.0
        %570 = vmatpush1.msra.mxu0 0.0
        %571 = vmatprep.subr.mxu0 0.0
        %572 = vmatpush1.msra.mxu0 0.0
        %573 = vmatprep.subr.mxu0 0.0
        %574 = vmatpush1.msra.mxu0 0.0
        %575 = vmatprep.subr.mxu0 0.0
        %576 = vmatpush1.msra.mxu0 0.0
        %577 = vmatprep.subr.mxu0 0.0
        %578 = vmatpush1.msra.mxu0 0.0
        %579 = vmatprep.subr.mxu0 0.0
        %580 = vmatpush1.msra.mxu0 0.0
        %581 = vmatprep.subr.mxu0 0.0
        %582 = vmatpush1.msra.mxu0 0.0
        %583 = vmatprep.subr.mxu0 0.0
        %584 = vmatpush1.msra.mxu0 0.0
        %585 = vmatprep.subr.mxu0 0.0
        %586 = vmatpush1.msra.mxu0 0.0
        %587 = vmatprep.subr.mxu0 0.0
        %588 = vmatpush1.msra.mxu0 0.0
        %589 = vmatprep.subr.mxu0 0.0
        %590 = vmatpush1.msra.mxu0 0.0
        %591 = vmatprep.subr.mxu0 0.0
        %592 = vmatpush1.msra.mxu0 0.0
        %593 = vmatprep.subr.mxu0 0.0
        %594 = vmatpush1.msra.mxu0 0.0
        %595 = vmatprep.subr.mxu0 0.0
        %596 = vmatpush1.msra.mxu0 0.0
        %597 = vmatprep.subr.mxu0 0.0
        %598 = vmatpush1.msra.mxu0 0.0
        %599 = vmatprep.subr.mxu0 0.0
        %600 = vmatpush1.msra.mxu0 0.0
        %601 = vmatprep.subr.mxu0 0.0
        %602 = vmatpush1.msra.mxu0 0.0
        %603 = vmatprep.mubr.f32.mxu0 0.0
        %604 = vmatmul.mubr.f32.gmra.mrb[0].mxu0 %v537
        %v605 = vpop.f32.mrb[0].mxu0
        %v606 = vadd.f32 %v533, %v605
        %v607 = vpop.f32.mrb[0].mxu0
        %608 = vdwg.mxu0
        %609 = vst [vmem:[%s267] sm:$0xf] %v606
        %s610 = sand.u32 %s181, 1
        %s611 = scalar_lea.sflag [#allocation3], %s610
        %s612 = sand.u32 %s181, 1
        %s613 = smul.addr %s612, 4
        %s614 = scalar_lea.vmem [#allocation2], %s613
        // Predicated region
        $region49: #{tpu_custom_call.1} parent=47 // pred_check
          %p615 = pneg %p191
        $region50: #{tpu_custom_call.1} parent=47 // pred_check_branch
          %617 = sbr.rel (%p615) target = $region52
        $region51: #{tpu_custom_call.1} parent=47 // pred_region
          %s619 = ssub.s32 64, 64
          %620 = vsyncadd %s611, %s619
          %s621 = smul.addr %s21, 64
          %s622 = scalar_lea.hbm %s7, %s621
          %s624 = sshll.u32 %s614, 4
          %s625 = int_to_ptr.vmem [resolvable:$true] %s624
          %627 = dma.vmem_to_hbm [thread:$0]  %s625, 64, %s622, %s611
        $region52: #{tpu_custom_call.1} parent=47 // pred_fallthru
          _
      $region48: #{tpu_custom_call.1} parent=5 // pred_fallthru
        _
      %p628 = scmp.le.s32.totalorder 2, %s16
      // Predicated region
      $region53: #{tpu_custom_call.1} parent=5 // pred_check
        %p629 = pneg %p628
      $region54: #{tpu_custom_call.1} parent=5 // pred_check_branch
        %631 = sbr.rel (%p629) target = $region56
      $region55: #{tpu_custom_call.1} parent=5 // pred_region
        %s632 = ssub.s32 %s16, 2
        // Predicated region
        $region57: #{tpu_custom_call.1} parent=55 // pred_check
          %p633 = pneg %p197
        $region58: #{tpu_custom_call.1} parent=55 // pred_check_branch
          %635 = sbr.rel (%p633) target = $region60
        $region59: #{tpu_custom_call.1} parent=55 // pred_region
          %s636 = sand.u32 %s182, 1
          %s637 = scalar_lea.sflag [#allocation3], %s636
          %s638 = sand.u32 %s182, 1
          %s639 = smul.addr %s638, 4
          %s640 = scalar_lea.vmem [#allocation2], %s639
          %641 = dma.done %s637, 64
        $region60: #{tpu_custom_call.1} parent=55 // pred_fallthru
          _
      $region56: #{tpu_custom_call.1} parent=5 // pred_fallthru
        _
    $region6: #{tpu_custom_call.1} parent=1 // loop_footer
      %s20 = sadd.s32 1, %s16
    $region7: #{tpu_custom_call.1} parent=1 // loop_footer_branch
      %15 = sbr.rel target = $region3
    $region8: #{tpu_custom_call.1} parent=1 // loop_exit
      _
    %642 = vsyncpa [#allocation3], 1
    %s643 = scalar_lea.sflag [#allocation3], 1
    %644 = vsyncpa %s643, 1

</llo_original>
